<compile_context>
chip_gen: v5e
topology: v5e:2x2
jax: 0.10.0
libtpu: 0.0.40
codegen_flags: <defaults>
</compile_context>

<pallas_src>
import jax
import jax.numpy as jnp
from jax.experimental import pallas as pl
from jax.experimental.pallas import tpu as pltpu


def _make_mish_kernel(compute_dtype):
    def kernel(x_ref, o_ref):
        x = x_ref[...].astype(compute_dtype)
        # One EUP transcendental per element.  Clamp at 20 mirrors PyTorch
        # softplus(threshold=20); for x > 20 the factor below rounds to 1.0.
        t = jnp.exp(jnp.minimum(x, 20.0))
        # tanh(softplus(x)) = ((1+t)^2 - 1) / ((1+t)^2 + 1) = m / (m + 2),
        # m = t*(t+2).  Cancellation-free for very negative x.
        m = t * (t + 2.0)
        tsp = m / (m + 2.0)
        o_ref[...] = (x * tsp).astype(o_ref.dtype)

    return kernel


def _tpu_tuning(dtype):
    """Per-generation block size / VMEM limit / compute dtype."""
    try:
        kind = jax.devices()[0].device_kind.lower()
    except Exception:  # pragma: no cover - defensive
        kind = ""
    if "v7" in kind:
        # 8 MiB blocks x 4 buffers = 32 MiB: raise the scoped limit explicitly
        # (64 MiB physical on v7x).
        block_bytes, vmem_limit = 8 * 1024 * 1024, 48 * 1024 * 1024
    elif "v6" in kind:
        # 4 MiB x 4 = 16 MiB, well under v6e's 32 MiB scoped default.
        block_bytes, vmem_limit = 4 * 1024 * 1024, None
    else:
        # v5e / older / unknown: 2 MiB x 4 = 8 MiB fits the 16 MiB default and
        # is already at the HBM roofline there.
        block_bytes, vmem_limit = 2 * 1024 * 1024, None
    bf16_native = ("v6" in kind) or ("v7" in kind)
    compute_dtype = (
        jnp.bfloat16 if (dtype == jnp.bfloat16 and bf16_native) else jnp.float32
    )
    return block_bytes, vmem_limit, compute_dtype


def mish(x, *, target_block_bytes=None):
    """Elementwise Mish: x * tanh(softplus(x)). Layout/shape agnostic."""
    orig_shape = x.shape
    orig_dtype = jnp.dtype(x.dtype)
    n = x.size
    if n == 0:
        return x

    itemsize = orig_dtype.itemsize
    block_bytes, vmem_limit, compute_dtype = _tpu_tuning(orig_dtype)
    if target_block_bytes is not None:
        block_bytes = target_block_bytes

    kernel = _make_mish_kernel(compute_dtype)
    cost = pl.CostEstimate(
        flops=7 * n, transcendentals=n, bytes_accessed=2 * n * itemsize
    )

    def compiler_params(grid_rank):
        kwargs = {}
        if grid_rank:
            kwargs["dimension_semantics"] = ("parallel",) * grid_rank
        if vmem_limit is not None:
            kwargs["vmem_limit_bytes"] = vmem_limit
        return pltpu.CompilerParams(**kwargs)

    x_flat = jnp.ravel(x)
    total_bytes = n * itemsize

    # --- common case: element count divisible by 128 -> lane-dense 2D slab ---
    W = None
    for cand in (4096, 2048, 1024, 512, 256, 128):
        if n % cand == 0:
            W = cand
            break

    if W is not None:
        rows = n // W
        x2d = x_flat.reshape(rows, W)
        # Row tile targeting ~block_bytes per block.
        tr = max(8, (block_bytes // (W * itemsize)) // 8 * 8)
        # Keep >= 4 grid steps for anything bigger than ~1 MiB so the DMA
        # pipeline overlaps and both v7x TensorCores get work.
        if total_bytes > (1 << 20):
            cap = max(8, (((rows + 3) // 4) + 7) // 8 * 8)
            tr = min(tr, cap)
        if tr >= rows:
            tr = rows  # single full-extent block (always a legal block shape)
        grid = (pl.cdiv(rows, tr),)  # ragged last row-block is masked by Pallas

        out2d = pl.pallas_call(
            kernel,
            out_shape=jax.ShapeDtypeStruct((rows, W), orig_dtype),
            grid_spec=pltpu.PrefetchScalarGridSpec(
                num_scalar_prefetch=0,
                grid=grid,
                in_specs=[pl.BlockSpec((tr, W), lambda i: (i, 0))],
                out_specs=pl.BlockSpec((tr, W), lambda i: (i, 0)),
            ),
            compiler_params=compiler_params(1),
            cost_estimate=cost,
        )(x2d)
        return out2d.reshape(orig_shape)

    # --- ragged path (n % 128 != 0): no pad/slice HBM passes ---
    blk = max(128, (block_bytes // itemsize) // 128 * 128)
    if total_bytes > (1 << 20):
        cap = max(128, (((n + 3) // 4) + 127) // 128 * 128)
        blk = min(blk, cap)

    if blk >= n:
        # Tiny tensor: single full-extent block, no grid.
        out_flat = pl.pallas_call(
            kernel,
            out_shape=jax.ShapeDtypeStruct((n,), orig_dtype),
            compiler_params=compiler_params(0),
            cost_estimate=cost,
        )(x_flat)
    else:
        # 1-D blocked; Pallas masks the ragged last block (OOB writes dropped).
        out_flat = pl.pallas_call(
            kernel,
            out_shape=jax.ShapeDtypeStruct((n,), orig_dtype),
            grid_spec=pltpu.PrefetchScalarGridSpec(
                num_scalar_prefetch=0,
                grid=(pl.cdiv(n, blk),),
                in_specs=[pl.BlockSpec((blk,), lambda i: (i,))],
                out_specs=pl.BlockSpec((blk,), lambda i: (i,)),
            ),
            compiler_params=compiler_params(1),
            cost_estimate=cost,
        )(x_flat)
    return out_flat.reshape(orig_shape)


def _mish_ref(x):
    # PyTorch-style reference: x * tanh(softplus(x)), softplus threshold=20.
    xf = x.astype(jnp.float32)
    sp = jnp.where(xf > 20.0, xf, jnp.log1p(jnp.exp(jnp.minimum(xf, 20.0))))
    return (xf * jnp.tanh(sp)).astype(jnp.float32)


if __name__ == "__main__":
    key = jax.random.PRNGKey(0)

    # NCHW example input, consistent with typical conv feature maps.
    x = jax.random.normal(key, (2, 4, 16, 16), dtype=jnp.float32) * 3.0
    y = jax.block_until_ready(mish(x))
    assert y.shape == x.shape and y.dtype == x.dtype
    assert jnp.max(jnp.abs(y.astype(jnp.float32) - _mish_ref(x))) < 1e-5

    # Ragged-size path (total elements not a multiple of 128).
    x2 = jax.random.normal(jax.random.PRNGKey(1), (3, 5, 7), dtype=jnp.float32) * 3.0
    y2 = jax.block_until_ready(mish(x2))
    assert y2.shape == x2.shape
    assert jnp.max(jnp.abs(y2.astype(jnp.float32) - _mish_ref(x2))) < 1e-5

    # Larger tensor (> 1 MiB) exercising the multi-step pipelined grid.
    x3 = jax.random.normal(jax.random.PRNGKey(2), (4, 32, 64, 64), dtype=jnp.float32) * 3.0
    y3 = jax.block_until_ready(mish(x3))
    assert y3.shape == x3.shape
    assert jnp.max(jnp.abs(y3.astype(jnp.float32) - _mish_ref(x3))) < 1e-5

    # Negative-tail values: cancellation-free form stays accurate.
    x4 = jnp.linspace(-30.0, 30.0, 8 * 128, dtype=jnp.float32).reshape(8, 128)
    y4 = jax.block_until_ready(mish(x4))
    assert jnp.max(jnp.abs(y4.astype(jnp.float32) - _mish_ref(x4))) < 1e-5

    # bf16 storage path (bf16 compute on v6e/v7x, f32 compute elsewhere).
    xb = x.astype(jnp.bfloat16)
    yb = jax.block_until_ready(mish(xb))
    assert yb.dtype == jnp.bfloat16 and yb.shape == xb.shape
    assert jnp.max(jnp.abs(yb.astype(jnp.float32) - _mish_ref(xb))) < 0.6

    print("KERNEL_OK")
</pallas_src>

<mosaic_0001>
module attributes {stable_mosaic.version = 11 : i64} {
  func.func @kernel(%arg0: i32, %arg1: memref<1x2048xf32, #tpu.memory_space<vmem>>, %arg2: memref<1x2048xf32, #tpu.memory_space<vmem>>) attributes {dimension_semantics = [#tpu.dimension_semantics<parallel>], iteration_bounds = array<i64: 1>, scalar_prefetch = 0 : i64, scratch_operands = 0 : i64, tpu.core_type = #tpu.core_type<tc>, window_params = [{transform_indices = @transform_0, window_bounds = array<i64: 1, 2048>}, {transform_indices = @transform_1, window_bounds = array<i64: 1, 2048>}]} {
    %c0 = arith.constant 0 : index
    %c0_0 = arith.constant 0 : index
    %0 = vector.load %arg1[%c0, %c0_0] : memref<1x2048xf32, #tpu.memory_space<vmem>>, vector<1x2048xf32>
    %cst = arith.constant 2.000000e+01 : f32
    %1 = vector.broadcast %cst : f32 to vector<1x2048xf32>
    %2 = arith.minimumf %0, %1 : vector<1x2048xf32>
    %3 = math.exp %2 : vector<1x2048xf32>
    %cst_1 = arith.constant 2.000000e+00 : f32
    %4 = vector.broadcast %cst_1 : f32 to vector<1x2048xf32>
    %5 = arith.addf %3, %4 : vector<1x2048xf32>
    %6 = arith.mulf %3, %5 : vector<1x2048xf32>
    %cst_2 = arith.constant 2.000000e+00 : f32
    %7 = vector.broadcast %cst_2 : f32 to vector<1x2048xf32>
    %8 = arith.addf %6, %7 : vector<1x2048xf32>
    %9 = arith.divf %6, %8 : vector<1x2048xf32>
    %10 = arith.mulf %0, %9 : vector<1x2048xf32>
    %c0_3 = arith.constant 0 : index
    %c0_4 = arith.constant 0 : index
    %11 = vector.load %arg2[%c0_3, %c0_4] : memref<1x2048xf32, #tpu.memory_space<vmem>>, vector<1x2048xf32>
    tpu.vector_store %arg2[%c0_3, %c0_4], %10 {strides = array<i32>} : memref<1x2048xf32, #tpu.memory_space<vmem>>, vector<1x2048xf32>,
    return
  }
  func.func @transform_0(%arg0: i32) -> (i32, i32) {
    %c0_i32 = arith.constant 0 : i32
    %c0_i32_0 = arith.constant 0 : i32
    return %arg0, %c0_i32 : i32, i32
  }
  func.func @transform_1(%arg0: i32) -> (i32, i32) {
    %c0_i32 = arith.constant 0 : i32
    %c0_i32_0 = arith.constant 0 : i32
    return %arg0, %c0_i32 : i32, i32
  }
}

</mosaic_0001>

<llo_original>
// kernel: tpu_custom_call.1
$region0: #{tpu_custom_call.1}
  #allocation0 [shape = 'u32[]', space=smem, size = 0x4, offset = 0x4, fixed_abs, tag = 'smem constant byte address 0x4 - core index']
  #allocation1 [shape = 'u32[72,128]{1,0:T(1,128)}', space=vmem, size = 0x9000, scoped, tag = 'internal scratch']
  %s0 = inlined_call_operand.hbm [shape: f32[1,2048], index: 0, kind: input, shape index: {}]
  %s1 = inlined_call_operand.hbm [shape: f32[1,2048], index: 1, kind: output, shape index: {}]
  %s2 = sld [smem:[#allocation0]]
  $region18: #{tpu_custom_call.1} parent=0
    _
  %s4 = ssub.s32 1, %s2
  %s5 = scalar_select 0, %s4, %s2
  $region1: #{tpu_custom_call.1} parent=0
    #allocation2 [shape = 'u8[8192]{0}', space=vmem, size = 0x2000, scoped, tag = 'input window, operand 0, single buffered']
    #allocation3 [shape = 's32[1]{0}', space=sflag, size = 0x4, scoped, tag = 'scoped memory for tpu_custom_call.1']
    #allocation4 [shape = 's32[1]{0}', space=sflag, size = 0x4, scoped, tag = 'scoped memory for tpu_custom_call.1']
    #allocation5 [shape = 'u8[8192]{0}', space=vmem, size = 0x2000, scoped, tag = 'output window, operand 0, single buffered']
    %6 = vsyncpa [#allocation3], 0
    %7 = vsyncpa [#allocation4], 0
    // Predicated region
    $region2: #{tpu_custom_call.1} parent=1 // pred_check
      _
    $region3: #{tpu_custom_call.1} parent=1 // pred_check_branch
      %9 = sbr.rel (0) target = $region5
    $region4: #{tpu_custom_call.1} parent=1 // pred_region
      %11 = vsyncadd [#allocation3], 0
      %s13 = sshll.u32 %s0, 4
      %s14 = int_to_ptr.hbm [resolvable:$true] %s13
      %s15 = sshll.u32 [#allocation2], 4
      %s16 = int_to_ptr.vmem [resolvable:$true] %s15
      %18 = dma.hbm_to_vmem [thread:$0]  %s14, 256, %s16, [#allocation3]
    $region5: #{tpu_custom_call.1} parent=1 // pred_fallthru
      _
    // Predicated region
    $region6: #{tpu_custom_call.1} parent=1 // pred_check
      _
    $region7: #{tpu_custom_call.1} parent=1 // pred_check_branch
      %20 = sbr.rel (0) target = $region9
    $region8: #{tpu_custom_call.1} parent=1 // pred_region
      %22 = dma.done [#allocation3], 256
    $region9: #{tpu_custom_call.1} parent=1 // pred_fallthru
      _
    %v23 = vld [vmem:[#allocation2] sm:$0xff]
    %v24 = vld [vmem:[#allocation2 + $0x8] sm:$0xff]
    %v25 = vmin.f32 %v23, 20.0
    %v26 = vmin.f32 %v24, 20.0
    %v27 = vmul.f32 %v25, 1.442695
    %v28 = vpow.pop %v27
    %v29 = vmul.f32 %v26, 1.442695
    %v30 = vpow.pop %v29
    %v31 = vadd.f32 %v28, 2.0
    %v32 = vadd.f32 %v30, 2.0
    %v33 = vmul.f32 %v28, %v31
    %v34 = vmul.f32 %v30, %v32
    %v35 = vadd.f32 %v33, 2.0
    %v36 = vadd.f32 %v34, 2.0
    %v37 = vrcp.pop %v35
    %v38 = vmul.f32 %v35, %v37
    %v39 = vsub.f32 1.0, %v38
    %v40 = vmul.f32 %v37, %v39
    %v41 = vadd.f32 %v37, %v40
    %vm42 = vweird.f32 %v35
    %vm43 = vweird.f32 %v37
    %vm44 = vmor %vm42, %vm43
    %v45 = vsel %vm44, %v37, %v41
    %v46 = vand.u32 2147483647, %v35
    %vm47 = vcmp.eq.f32.partialorder %v46, 8.507059e+37
    %v48 = vand.u32 %v35, 2147483648
    %v49 = vor.u32 1.1754944e-38, %v48
    %v50 = vsel %vm47, %v49, %v45
    %v51 = vmul.f32 %v33, %v50
    %v52 = vrcp.pop %v36
    %v53 = vmul.f32 %v36, %v52
    %v54 = vsub.f32 1.0, %v53
    %v55 = vmul.f32 %v52, %v54
    %v56 = vadd.f32 %v52, %v55
    %vm57 = vweird.f32 %v36
    %vm58 = vweird.f32 %v52
    %vm59 = vmor %vm57, %vm58
    %v60 = vsel %vm59, %v52, %v56
    %v61 = vand.u32 2147483647, %v36
    %vm62 = vcmp.eq.f32.partialorder %v61, 8.507059e+37
    %v63 = vand.u32 %v36, 2147483648
    %v64 = vor.u32 1.1754944e-38, %v63
    %v65 = vsel %vm62, %v64, %v60
    %v66 = vmul.f32 %v34, %v65
    %v67 = vmul.f32 %v23, %v51
    %v68 = vmul.f32 %v24, %v66
    %69 = vst [vmem:[#allocation5] sm:$0xff] %v67
    %70 = vst [vmem:[#allocation5 + $0x8] sm:$0xff] %v68
    // Predicated region
    $region10: #{tpu_custom_call.1} parent=1 // pred_check
      _
    $region11: #{tpu_custom_call.1} parent=1 // pred_check_branch
      %72 = sbr.rel (0) target = $region13
    $region12: #{tpu_custom_call.1} parent=1 // pred_region
      %74 = vsyncadd [#allocation4], 0
      %s76 = sshll.u32 [#allocation5], 4
      %s77 = int_to_ptr.vmem [resolvable:$true] %s76
      %s78 = sshll.u32 %s1, 4
      %s79 = int_to_ptr.hbm [resolvable:$true] %s78
      %81 = dma.vmem_to_hbm [thread:$0]  %s77, 256, %s79, [#allocation4]
    $region13: #{tpu_custom_call.1} parent=1 // pred_fallthru
      _
    // Predicated region
    $region14: #{tpu_custom_call.1} parent=1 // pred_check
      _
    $region15: #{tpu_custom_call.1} parent=1 // pred_check_branch
      %83 = sbr.rel (0) target = $region17
    $region16: #{tpu_custom_call.1} parent=1 // pred_region
      %85 = dma.done [#allocation4], 256
    $region17: #{tpu_custom_call.1} parent=1 // pred_fallthru
      _
    %86 = vsyncpa [#allocation3], 1
    %87 = vsyncpa [#allocation4], 1

</llo_original>
